<compile_context>
chip_gen: v6e
topology: v6e:2x2x1
jax: 0.10.0
libtpu: 0.0.40
codegen_flags: <defaults>
</compile_context>

<pallas_src>
import jax
import jax.numpy as jnp
from jax.experimental import pallas as pl
from jax.experimental.pallas import tpu as pltpu


# ---------------------------------------------------------------------------
# Pallas kernel: y = relu(x @ W1 + b1) @ W2 + b2   (per token tile)
# ---------------------------------------------------------------------------
def base_pl_sublayer_kernel(x_ref, w1_ref, b1_ref, w2_ref, b2_ref, o_ref):
    x = x_ref[...].astype(jnp.bfloat16)                                # in-kernel cast (no HBM cast pass)
    h = jnp.dot(x, w1_ref[...], preferred_element_type=jnp.float32)    # (TM, Dmid_p) f32 acc
    h = jnp.maximum(h + b1_ref[...], 0.0)                              # bias + ReLU in f32
    y = jnp.dot(h.astype(jnp.bfloat16), w2_ref[...],
                preferred_element_type=jnp.float32)                    # (TM, Dout_p) f32 acc
    y = y + b2_ref[...]
    o_ref[...] = y.astype(o_ref.dtype)                                 # cast only at the store


def _round_up(x, m):
    return ((x + m - 1) // m) * m


def _chip_defaults():
    """(TM, vmem_limit_bytes, x_buffer_count) tuned per TPU generation."""
    vmem = None
    try:
        vmem = getattr(pltpu.get_tpu_info(), "vmem_capacity_bytes", None)
    except Exception:
        vmem = None
    if vmem is None:
        # Unknown chip -> conservative (fits v7x's 64 MiB per TensorCore).
        return 256, 48 * 1024 * 1024, 2
    if vmem <= 96 * 1024 * 1024:
        # v7x: 64 MiB VMEM / 3.2 TB/s HBM -> smaller tile, deeper x buffering.
        return 256, 48 * 1024 * 1024, 3
    # v5e / v6e: 128 MiB VMEM -> bigger token tile amortizes per-step overhead.
    return 512, 96 * 1024 * 1024, 2


# ---------------------------------------------------------------------------
# One-time parameter prep (hoisted out of the per-call forward, cache the result)
# ---------------------------------------------------------------------------
def prepare_params(w1, b1, w2, b2):
    """Pad feature dims to lane multiples of 128 and cast GEMM operands to bf16.

    Zero-padding is semantics-preserving: padded mid columns give ReLU(0 + 0) = 0 and the
    matching padded W2 rows are 0; padded output columns are sliced away in the wrapper.
    """
    D_in, D_mid = w1.shape
    D_out = w2.shape[1]
    D_in_p, D_mid_p, D_out_p = (_round_up(d, 128) for d in (D_in, D_mid, D_out))
    w1p = jnp.pad(w1, ((0, D_in_p - D_in), (0, D_mid_p - D_mid))).astype(jnp.bfloat16)
    w2p = jnp.pad(w2, ((0, D_mid_p - D_mid), (0, D_out_p - D_out))).astype(jnp.bfloat16)
    b1p = jnp.pad(b1, (0, D_mid_p - D_mid)).reshape(1, D_mid_p).astype(jnp.float32)
    b2p = jnp.pad(b2, (0, D_out_p - D_out)).reshape(1, D_out_p).astype(jnp.float32)
    return (w1p, b1p, w2p, b2p, D_in, D_mid, D_out)


# ---------------------------------------------------------------------------
# Forward wrapper
# ---------------------------------------------------------------------------
def base_pl_sublayer_forward(x, params, *, tm=None, vmem_limit_bytes=None, x_buffers=None):
    """x: (B, S, D_in). params: output of prepare_params()."""
    w1p, b1p, w2p, b2p, D_in, D_mid, D_out = params
    B, S, d_in_x = x.shape
    assert d_in_x == D_in, f"x feature dim {d_in_x} != W1 rows {D_in}"
    T = B * S
    out_dtype = x.dtype

    D_in_p, D_mid_p = w1p.shape
    D_out_p = w2p.shape[1]

    tm_d, vmem_d, xbuf_d = _chip_defaults()
    TM = tm if tm is not None else tm_d
    vmem_limit_bytes = vmem_limit_bytes if vmem_limit_bytes is not None else vmem_d
    x_buffers = x_buffers if x_buffers is not None else xbuf_d

    # Token tile: multiple of 8 sublanes; rebalanced so the last (masked) tile wastes
    # as little compute as possible (no token padding thanks to cdiv + partial blocks).
    TM = min(TM, _round_up(T, 8))
    n_tiles = pl.cdiv(T, TM)
    TM = _round_up(pl.cdiv(T, n_tiles), 8)
    grid_m = pl.cdiv(T, TM)

    # x: pad the feature dim only if it is not already lane-aligned. The bf16 cast
    # happens inside the kernel, so no standalone cast pass touches HBM.
    x2d = x.reshape(T, D_in)
    if D_in_p != D_in:
        x2d = jnp.pad(x2d, ((0, 0), (0, D_in_p - D_in)))

    cost = pl.CostEstimate(
        flops=2 * T * (D_in_p * D_mid_p + D_mid_p * D_out_p),
        transcendentals=0,
        bytes_accessed=(x2d.size * x2d.dtype.itemsize
                        + w1p.size * 2 + w2p.size * 2 + b1p.size * 4 + b2p.size * 4
                        + T * D_out_p * jnp.dtype(out_dtype).itemsize),
    )

    def _call(use_pipeline_modes):
        def spec(shape, index_map, buffers):
            if use_pipeline_modes and buffers != 2:
                return pl.BlockSpec(shape, index_map, pipeline_mode=pl.Buffered(buffers))
            return pl.BlockSpec(shape, index_map)

        return pl.pallas_call(
            base_pl_sublayer_kernel,
            out_shape=jax.ShapeDtypeStruct((T, D_out_p), out_dtype),
            grid_spec=pltpu.PrefetchScalarGridSpec(
                num_scalar_prefetch=0,
                grid=(grid_m,),
                in_specs=[
                    spec((TM, D_in_p), lambda i: (i, 0), x_buffers),        # streamed tokens
                    spec((D_in_p, D_mid_p), lambda i: (0, 0), 1),           # VMEM-resident weight
                    spec((1, D_mid_p), lambda i: (0, 0), 1),
                    spec((D_mid_p, D_out_p), lambda i: (0, 0), 1),          # VMEM-resident weight
                    spec((1, D_out_p), lambda i: (0, 0), 1),
                ],
                out_specs=pl.BlockSpec((TM, D_out_p), lambda i: (i, 0)),
            ),
            compiler_params=pltpu.CompilerParams(
                dimension_semantics=("parallel",),        # token axis is embarrassingly parallel
                vmem_limit_bytes=vmem_limit_bytes,
            ),
            cost_estimate=cost,
        )(x2d, w1p, b1p, w2p, b2p)

    try:
        out2d = _call(True)
    except Exception:
        # Fallback for JAX builds that reject pipeline_mode=pl.Buffered(...).
        out2d = _call(False)

    if D_out_p != D_out:                      # slice only when the feature dim was padded
        out2d = out2d[:, :D_out]
    return out2d.reshape(B, S, D_out)


# ---------------------------------------------------------------------------
# Deterministic parameter construction (mirrors module __init__ shapes)
# ---------------------------------------------------------------------------
def make_params(key, in_features, mid_features, out_features, phm_dim, zero_w2=True):
    k_rule, k_w, k_b1, k_w2, k_b2 = jax.random.split(key, 5)

    # PHM rule: (phm_dim, phm_dim, phm_dim); per-component weights (phm_dim, in/pd, mid/pd).
    phm_rule = jax.random.normal(k_rule, (phm_dim, phm_dim, phm_dim), dtype=jnp.float32) * 0.1
    w_phm = jax.random.normal(
        k_w, (phm_dim, in_features // phm_dim, mid_features // phm_dim), dtype=jnp.float32) * 0.1

    # W1 = sum_i kron(phm_rule[i], w_phm[i])  -> (in_features, mid_features)
    kron = jnp.einsum('ipq,ist->pqst', phm_rule, w_phm)
    w1 = kron.transpose(0, 2, 1, 3).reshape(in_features, mid_features)
    b1 = jax.random.normal(k_b1, (mid_features,), dtype=jnp.float32) * 0.01

    if zero_w2:
        w2 = jnp.zeros((mid_features, out_features), dtype=jnp.float32)  # module zero-inits ff2.weight
    else:
        w2 = jax.random.normal(k_w2, (mid_features, out_features), dtype=jnp.float32) * 0.1
    b2 = jax.random.normal(k_b2, (out_features,), dtype=jnp.float32) * 0.01
    return w1, b1, w2, b2


def reference_forward(x, w1, b1, w2, b2):
    """bf16-faithful reference matching the kernel's numerics (f32 accumulation).

    Deliberate numerics choice: x, W1, W2 and the intermediate h are quantized to bf16
    (MXU inputs) with f32 accumulation; covered by the 5e-3 tolerance below.
    """
    xb = x.astype(jnp.bfloat16).astype(jnp.float32)
    w1b = w1.astype(jnp.bfloat16).astype(jnp.float32)
    w2b = w2.astype(jnp.bfloat16).astype(jnp.float32)
    h = jnp.maximum(jnp.einsum('bsd,dm->bsm', xb, w1b) + b1, 0.0)
    hb = h.astype(jnp.bfloat16).astype(jnp.float32)
    return jnp.einsum('bsm,mo->bso', hb, w2b) + b2


if __name__ == "__main__":
    key = jax.random.PRNGKey(0)

    # --- Test 1: module-faithful small config (ff2.weight zero-initialized) ------------
    in_f, mid_f, out_f, phm_dim = 32, 32, 32, 4
    B, S = 2, 8
    k_x, k_p, key = jax.random.split(key, 3)
    x = jax.random.normal(k_x, (B, S, in_f), dtype=jnp.float32)
    w1, b1, w2, b2 = make_params(k_p, in_f, mid_f, out_f, phm_dim, zero_w2=True)
    params = prepare_params(w1, b1, w2, b2)      # one-time prep, reused across calls

    out = jax.block_until_ready(base_pl_sublayer_forward(x, params))
    ref = reference_forward(x, w1, b1, w2, b2)
    assert out.shape == (B, S, out_f)
    assert jnp.allclose(out, ref, atol=5e-3, rtol=5e-3)

    # --- Test 2: nonzero w2, unaligned feature dims, multi-tile token grid --------------
    in_f2, mid_f2, out_f2, phm_dim2 = 48, 96, 64, 4
    B2, S2 = 2, 200   # T=400 -> multiple balanced token tiles (partial last block exercised)
    k_x2, k_p2 = jax.random.split(key)
    x2 = jax.random.normal(k_x2, (B2, S2, in_f2), dtype=jnp.float32)
    w1b_, b1b_, w2b_, b2b_ = make_params(k_p2, in_f2, mid_f2, out_f2, phm_dim2, zero_w2=False)
    params2 = prepare_params(w1b_, b1b_, w2b_, b2b_)

    out2 = jax.block_until_ready(
        base_pl_sublayer_forward(x2, params2, tm=256))   # force grid_m >= 2 at this T
    ref2 = reference_forward(x2, w1b_, b1b_, w2b_, b2b_)
    assert out2.shape == (B2, S2, out_f2)
    assert jnp.allclose(out2, ref2, atol=5e-3, rtol=5e-3)

    print("KERNEL_OK")
</pallas_src>

<mosaic_0001>
module attributes {stable_mosaic.version = 11 : i64} {
  func.func @base_pl_sublayer_kernel(%arg0: i32, %arg1: memref<16x128xf32, #tpu.memory_space<vmem>>, %arg2: memref<128x128xbf16, #tpu.memory_space<vmem>>, %arg3: memref<1x128xf32, #tpu.memory_space<vmem>>, %arg4: memref<128x128xbf16, #tpu.memory_space<vmem>>, %arg5: memref<1x128xf32, #tpu.memory_space<vmem>>, %arg6: memref<16x128xf32, #tpu.memory_space<vmem>>) attributes {dimension_semantics = [#tpu.dimension_semantics<parallel>], iteration_bounds = array<i64: 1>, scalar_prefetch = 0 : i64, scratch_operands = 0 : i64, tpu.core_type = #tpu.core_type<tc>, window_params = [{transform_indices = @transform_0, window_bounds = array<i64: 16, 128>}, {pipeline_mode = #tpu.pipeline_mode<synchronous>, transform_indices = @transform_1, window_bounds = array<i64: 128, 128>}, {pipeline_mode = #tpu.pipeline_mode<synchronous>, transform_indices = @transform_2, window_bounds = array<i64: 1, 128>}, {pipeline_mode = #tpu.pipeline_mode<synchronous>, transform_indices = @transform_3, window_bounds = array<i64: 128, 128>}, {pipeline_mode = #tpu.pipeline_mode<synchronous>, transform_indices = @transform_4, window_bounds = array<i64: 1, 128>}, {transform_indices = @transform_5, window_bounds = array<i64: 16, 128>}]} {
    %c0 = arith.constant 0 : index
    %c0_0 = arith.constant 0 : index
    %0 = vector.load %arg1[%c0, %c0_0] : memref<16x128xf32, #tpu.memory_space<vmem>>, vector<16x128xf32>
    %1 = arith.truncf %0 : vector<16x128xf32> to vector<16x128xbf16>
    %c0_1 = arith.constant 0 : index
    %c0_2 = arith.constant 0 : index
    %2 = vector.load %arg2[%c0_1, %c0_2] : memref<128x128xbf16, #tpu.memory_space<vmem>>, vector<128x128xbf16>
    %cst = arith.constant dense<0.000000e+00> : vector<16x128xf32>
    %3 = tpu.matmul %1, %2, %cst {dimension_numbers = #tpu.dot_dimension_numbers<[1], [0], [0], [1], [0, 0, 1, 1], [], []>} : vector<16x128xbf16>, vector<128x128xbf16>, vector<16x128xf32> -> vector<16x128xf32>
    %c0_3 = arith.constant 0 : index
    %c0_4 = arith.constant 0 : index
    %4 = vector.load %arg3[%c0_3, %c0_4] : memref<1x128xf32, #tpu.memory_space<vmem>>, vector<1x128xf32>
    %5 = vector.broadcast %4 : vector<1x128xf32> to vector<16x128xf32>
    %6 = arith.addf %3, %5 : vector<16x128xf32>
    %cst_5 = arith.constant 0.000000e+00 : f32
    %7 = vector.broadcast %cst_5 : f32 to vector<16x128xf32>
    %8 = arith.maximumf %6, %7 : vector<16x128xf32>
    %9 = arith.truncf %8 : vector<16x128xf32> to vector<16x128xbf16>
    %c0_6 = arith.constant 0 : index
    %c0_7 = arith.constant 0 : index
    %10 = vector.load %arg4[%c0_6, %c0_7] : memref<128x128xbf16, #tpu.memory_space<vmem>>, vector<128x128xbf16>
    %cst_8 = arith.constant dense<0.000000e+00> : vector<16x128xf32>
    %11 = tpu.matmul %9, %10, %cst_8 {dimension_numbers = #tpu.dot_dimension_numbers<[1], [0], [0], [1], [0, 0, 1, 1], [], []>} : vector<16x128xbf16>, vector<128x128xbf16>, vector<16x128xf32> -> vector<16x128xf32>
    %c0_9 = arith.constant 0 : index
    %c0_10 = arith.constant 0 : index
    %12 = vector.load %arg5[%c0_9, %c0_10] : memref<1x128xf32, #tpu.memory_space<vmem>>, vector<1x128xf32>
    %13 = vector.broadcast %12 : vector<1x128xf32> to vector<16x128xf32>
    %14 = arith.addf %11, %13 : vector<16x128xf32>
    %c0_11 = arith.constant 0 : index
    %c0_12 = arith.constant 0 : index
    %15 = vector.load %arg6[%c0_11, %c0_12] : memref<16x128xf32, #tpu.memory_space<vmem>>, vector<16x128xf32>
    tpu.vector_store %arg6[%c0_11, %c0_12], %14 {strides = array<i32>} : memref<16x128xf32, #tpu.memory_space<vmem>>, vector<16x128xf32>,
    return
  }
  func.func @transform_0(%arg0: i32) -> (i32, i32) {
    %c0_i32 = arith.constant 0 : i32
    %c0_i32_0 = arith.constant 0 : i32
    return %arg0, %c0_i32 : i32, i32
  }
  func.func @transform_1(%arg0: i32) -> (i32, i32) {
    %c0_i32 = arith.constant 0 : i32
    %c0_i32_0 = arith.constant 0 : i32
    %c0_i32_1 = arith.constant 0 : i32
    return %c0_i32, %c0_i32_0 : i32, i32
  }
  func.func @transform_2(%arg0: i32) -> (i32, i32) {
    %c0_i32 = arith.constant 0 : i32
    %c0_i32_0 = arith.constant 0 : i32
    %c0_i32_1 = arith.constant 0 : i32
    return %c0_i32, %c0_i32_0 : i32, i32
  }
  func.func @transform_3(%arg0: i32) -> (i32, i32) {
    %c0_i32 = arith.constant 0 : i32
    %c0_i32_0 = arith.constant 0 : i32
    %c0_i32_1 = arith.constant 0 : i32
    return %c0_i32, %c0_i32_0 : i32, i32
  }
  func.func @transform_4(%arg0: i32) -> (i32, i32) {
    %c0_i32 = arith.constant 0 : i32
    %c0_i32_0 = arith.constant 0 : i32
    %c0_i32_1 = arith.constant 0 : i32
    return %c0_i32, %c0_i32_0 : i32, i32
  }
  func.func @transform_5(%arg0: i32) -> (i32, i32) {
    %c0_i32 = arith.constant 0 : i32
    %c0_i32_0 = arith.constant 0 : i32
    return %arg0, %c0_i32 : i32, i32
  }
}

module attributes {stable_mosaic.version = 11 : i64} {
  func.func @base_pl_sublayer_kernel(%arg0: i32, %arg1: memref<16x128xf32, #tpu.memory_space<vmem>>, %arg2: memref<128x128xbf16, #tpu.memory_space<vmem>>, %arg3: memref<1x128xf32, #tpu.memory_space<vmem>>, %arg4: memref<128x128xbf16, #tpu.memory_space<vmem>>, %arg5: memref<1x128xf32, #tpu.memory_space<vmem>>, %arg6: memref<16x128xf32, #tpu.memory_space<vmem>>) attributes {dimension_semantics = [#tpu.dimension_semantics<parallel>], iteration_bounds = array<i64: 1>, scalar_prefetch = 0 : i64, scratch_operands = 0 : i64, tpu.core_type = #tpu.core_type<tc>, window_params = [{transform_indices = @transform_0, window_bounds = array<i64: 16, 128>}, {pipeline_mode = #tpu.pipeline_mode<synchronous>, transform_indices = @transform_1, window_bounds = array<i64: 128, 128>}, {pipeline_mode = #tpu.pipeline_mode<synchronous>, transform_indices = @transform_2, window_bounds = array<i64: 1, 128>}, {pipeline_mode = #tpu.pipeline_mode<synchronous>, transform_indices = @transform_3, window_bounds = array<i64: 128, 128>}, {pipeline_mode = #tpu.pipeline_mode<synchronous>, transform_indices = @transform_4, window_bounds = array<i64: 1, 128>}, {transform_indices = @transform_5, window_bounds = array<i64: 16, 128>}]} {
    %c0 = arith.constant 0 : index
    %c0_0 = arith.constant 0 : index
    %0 = vector.load %arg1[%c0, %c0_0] : memref<16x128xf32, #tpu.memory_space<vmem>>, vector<16x128xf32>
    %1 = arith.truncf %0 : vector<16x128xf32> to vector<16x128xbf16>
    %c0_1 = arith.constant 0 : index
    %c0_2 = arith.constant 0 : index
    %2 = vector.load %arg2[%c0_1, %c0_2] : memref<128x128xbf16, #tpu.memory_space<vmem>>, vector<128x128xbf16>
    %cst = arith.constant dense<0.000000e+00> : vector<16x128xf32>
    %3 = tpu.matmul %1, %2, %cst {dimension_numbers = #tpu.dot_dimension_numbers<[1], [0], [0], [1], [0, 0, 1, 1], [], []>} : vector<16x128xbf16>, vector<128x128xbf16>, vector<16x128xf32> -> vector<16x128xf32>
    %c0_3 = arith.constant 0 : index
    %c0_4 = arith.constant 0 : index
    %4 = vector.load %arg3[%c0_3, %c0_4] : memref<1x128xf32, #tpu.memory_space<vmem>>, vector<1x128xf32>
    %5 = vector.broadcast %4 : vector<1x128xf32> to vector<16x128xf32>
    %6 = arith.addf %3, %5 : vector<16x128xf32>
    %cst_5 = arith.constant 0.000000e+00 : f32
    %7 = vector.broadcast %cst_5 : f32 to vector<16x128xf32>
    %8 = arith.maximumf %6, %7 : vector<16x128xf32>
    %9 = arith.truncf %8 : vector<16x128xf32> to vector<16x128xbf16>
    %c0_6 = arith.constant 0 : index
    %c0_7 = arith.constant 0 : index
    %10 = vector.load %arg4[%c0_6, %c0_7] : memref<128x128xbf16, #tpu.memory_space<vmem>>, vector<128x128xbf16>
    %cst_8 = arith.constant dense<0.000000e+00> : vector<16x128xf32>
    %11 = tpu.matmul %9, %10, %cst_8 {dimension_numbers = #tpu.dot_dimension_numbers<[1], [0], [0], [1], [0, 0, 1, 1], [], []>} : vector<16x128xbf16>, vector<128x128xbf16>, vector<16x128xf32> -> vector<16x128xf32>
    %c0_9 = arith.constant 0 : index
    %c0_10 = arith.constant 0 : index
    %12 = vector.load %arg5[%c0_9, %c0_10] : memref<1x128xf32, #tpu.memory_space<vmem>>, vector<1x128xf32>
    %13 = vector.broadcast %12 : vector<1x128xf32> to vector<16x128xf32>
    %14 = arith.addf %11, %13 : vector<16x128xf32>
    %c0_11 = arith.constant 0 : index
    %c0_12 = arith.constant 0 : index
    %15 = vector.load %arg6[%c0_11, %c0_12] : memref<16x128xf32, #tpu.memory_space<vmem>>, vector<16x128xf32>
    tpu.vector_store %arg6[%c0_11, %c0_12], %14 {strides = array<i32>} : memref<16x128xf32, #tpu.memory_space<vmem>>, vector<16x128xf32>,
    return
  }
  func.func @transform_0(%arg0: i32) -> (i32, i32) {
    %c0_i32 = arith.constant 0 : i32
    %c0_i32_0 = arith.constant 0 : i32
    return %arg0, %c0_i32 : i32, i32
  }
  func.func @transform_1(%arg0: i32) -> (i32, i32) {
    %c0_i32 = arith.constant 0 : i32
    %c0_i32_0 = arith.constant 0 : i32
    %c0_i32_1 = arith.constant 0 : i32
    return %c0_i32, %c0_i32_0 : i32, i32
  }
  func.func @transform_2(%arg0: i32) -> (i32, i32) {
    %c0_i32 = arith.constant 0 : i32
    %c0_i32_0 = arith.constant 0 : i32
    %c0_i32_1 = arith.constant 0 : i32
    return %c0_i32, %c0_i32_0 : i32, i32
  }
  func.func @transform_3(%arg0: i32) -> (i32, i32) {
    %c0_i32 = arith.constant 0 : i32
    %c0_i32_0 = arith.constant 0 : i32
    %c0_i32_1 = arith.constant 0 : i32
    return %c0_i32, %c0_i32_0 : i32, i32
  }
  func.func @transform_4(%arg0: i32) -> (i32, i32) {
    %c0_i32 = arith.constant 0 : i32
    %c0_i32_0 = arith.constant 0 : i32
    %c0_i32_1 = arith.constant 0 : i32
    return %c0_i32, %c0_i32_0 : i32, i32
  }
  func.func @transform_5(%arg0: i32) -> (i32, i32) {
    %c0_i32 = arith.constant 0 : i32
    %c0_i32_0 = arith.constant 0 : i32
    return %arg0, %c0_i32 : i32, i32
  }
}

</mosaic_0001>

<llo_original>
// kernel: tpu_custom_call.1
$region0: #{tpu_custom_call.1}
  #allocation0 [shape = 'u32[]', space=smem, size = 0x4, offset = 0x4, fixed_abs, tag = 'smem constant byte address 0x4 - core index']
  #allocation1 [shape = 'u32[144,128]{1,0:T(1,128)}', space=vmem, size = 0x12000, scoped, tag = 'internal scratch']
  %s0 = inlined_call_operand.hbm [shape: f32[16,128], index: 0, kind: input, shape index: {}]
  %s1 = inlined_call_operand.hbm [shape: bf16[128,128], index: 1, kind: input, shape index: {}]
  %s2 = inlined_call_operand.vmem [shape: f32[1,128], index: 2, kind: input, shape index: {}]
  %s3 = inlined_call_operand.hbm [shape: bf16[128,128], index: 3, kind: input, shape index: {}]
  %s4 = inlined_call_operand.vmem [shape: f32[1,128], index: 4, kind: input, shape index: {}]
  %s5 = inlined_call_operand.hbm [shape: f32[16,128], index: 5, kind: output, shape index: {}]
  %s6 = sld [smem:[#allocation0]]
  $region42: #{tpu_custom_call.1} parent=0
    _
  %s8 = ssub.s32 1, %s6
  %s9 = scalar_select 0, %s8, %s6
  $region1: #{tpu_custom_call.1} parent=0
    #allocation2 [shape = 'u8[8192]{0}', space=vmem, size = 0x2000, scoped, tag = 'input window, operand 0, single buffered']
    #allocation3 [shape = 's32[1]{0}', space=sflag, size = 0x4, scoped, tag = 'scoped memory for tpu_custom_call.1']
    #allocation4 [shape = 's32[1]{0}', space=sflag, size = 0x4, scoped, tag = 'scoped memory for tpu_custom_call.1']
    #allocation5 [shape = 'u8[32768]{0}', space=vmem, size = 0x8000, scoped, tag = 'input window, operand 1, single buffered']
    #allocation6 [shape = 's32[1]{0}', space=sflag, size = 0x4, scoped, tag = 'scoped memory for tpu_custom_call.1']
    #allocation7 [shape = 'u8[32768]{0}', space=vmem, size = 0x8000, scoped, tag = 'input window, operand 3, single buffered']
    #allocation8 [shape = 'u8[8192]{0}', space=vmem, size = 0x2000, scoped, tag = 'output window, operand 0, single buffered']
    %10 = vsyncpa [#allocation3], 0
    %11 = vsyncpa [#allocation6], 0
    %12 = vsyncpa [#allocation4], 0
    // Predicated region
    $region2: #{tpu_custom_call.1} parent=1 // pred_check
      _
    $region3: #{tpu_custom_call.1} parent=1 // pred_check_branch
      %14 = sbr.rel (0) target = $region5
    $region4: #{tpu_custom_call.1} parent=1 // pred_region
      %s16 = ssub.s32 256, 256
      %17 = vsyncadd [#allocation3], %s16
      %s18 = sshll.u32 [#allocation2], 4
      %s19 = int_to_ptr.vmem [resolvable:$true] %s18
      %24 = dma.hbm_to_vmem [thread:$0]  %s0, 256, %s19, [#allocation3], 128, 128, 8
    $region5: #{tpu_custom_call.1} parent=1 // pred_fallthru
      _
    // Predicated region
    $region6: #{tpu_custom_call.1} parent=1 // pred_check
      _
    $region7: #{tpu_custom_call.1} parent=1 // pred_check_branch
      %26 = sbr.rel (0) target = $region9
    $region8: #{tpu_custom_call.1} parent=1 // pred_region
      %s28 = ssub.s32 1024, 1024
      %29 = vsyncadd [#allocation6], %s28
      %s30 = sshll.u32 [#allocation5], 4
      %s31 = int_to_ptr.vmem [resolvable:$true] %s30
      %36 = dma.hbm_to_vmem [thread:$0]  %s1, 1024, %s31, [#allocation6], 64, 64, 4
    $region9: #{tpu_custom_call.1} parent=1 // pred_fallthru
      _
    // Predicated region
    $region10: #{tpu_custom_call.1} parent=1 // pred_check
      _
    $region11: #{tpu_custom_call.1} parent=1 // pred_check_branch
      %38 = sbr.rel (0) target = $region13
    $region12: #{tpu_custom_call.1} parent=1 // pred_region
      _
    $region13: #{tpu_custom_call.1} parent=1 // pred_fallthru
      _
    // Predicated region
    $region14: #{tpu_custom_call.1} parent=1 // pred_check
      _
    $region15: #{tpu_custom_call.1} parent=1 // pred_check_branch
      %40 = sbr.rel (0) target = $region17
    $region16: #{tpu_custom_call.1} parent=1 // pred_region
      %s42 = ssub.s32 1024, 1024
      %43 = vsyncadd [#allocation6], %s42
      %s44 = sshll.u32 [#allocation7], 4
      %s45 = int_to_ptr.vmem [resolvable:$true] %s44
      %50 = dma.hbm_to_vmem [thread:$0]  %s3, 1024, %s45, [#allocation6], 64, 64, 4
    $region17: #{tpu_custom_call.1} parent=1 // pred_fallthru
      _
    // Predicated region
    $region18: #{tpu_custom_call.1} parent=1 // pred_check
      _
    $region19: #{tpu_custom_call.1} parent=1 // pred_check_branch
      %52 = sbr.rel (0) target = $region21
    $region20: #{tpu_custom_call.1} parent=1 // pred_region
      _
    $region21: #{tpu_custom_call.1} parent=1 // pred_fallthru
      _
    // Predicated region
    $region22: #{tpu_custom_call.1} parent=1 // pred_check
      _
    $region23: #{tpu_custom_call.1} parent=1 // pred_check_branch
      %54 = sbr.rel (0) target = $region25
    $region24: #{tpu_custom_call.1} parent=1 // pred_region
      %55 = dma.done [#allocation3], 256
    $region25: #{tpu_custom_call.1} parent=1 // pred_fallthru
      _
    // Predicated region
    $region26: #{tpu_custom_call.1} parent=1 // pred_check
      _
    $region27: #{tpu_custom_call.1} parent=1 // pred_check_branch
      %57 = sbr.rel (0) target = $region29
    $region28: #{tpu_custom_call.1} parent=1 // pred_region
      %58 = dma.done [#allocation6], 1024
    $region29: #{tpu_custom_call.1} parent=1 // pred_fallthru
      _
    // Predicated region
    $region30: #{tpu_custom_call.1} parent=1 // pred_check
      _
    $region31: #{tpu_custom_call.1} parent=1 // pred_check_branch
      %60 = sbr.rel (0) target = $region33
    $region32: #{tpu_custom_call.1} parent=1 // pred_region
      %61 = dma.done [#allocation6], 1024
    $region33: #{tpu_custom_call.1} parent=1 // pred_fallthru
      _
    %v63 = vld [vmem:[#allocation2] sm:$0xff]
    %v64 = vld [vmem:[#allocation2 + $0x8] sm:$0xff]
    %v65 = vpack.c.bf16 %v64, %v63
    %v66 = vld [vmem:[#allocation5] sm:$0xf]
    %v67 = vld [vmem:[#allocation5 + $0x4] sm:$0xf]
    %v68 = vld [vmem:[#allocation5 + $0x8] sm:$0xf]
    %v69 = vld [vmem:[#allocation5 + $0xc] sm:$0xf]
    %v70 = vld [vmem:[#allocation5 + $0x10] sm:$0xf]
    %v71 = vld [vmem:[#allocation5 + $0x14] sm:$0xf]
    %v72 = vld [vmem:[#allocation5 + $0x18] sm:$0xf]
    %v73 = vld [vmem:[#allocation5 + $0x1c] sm:$0xf]
    %v74 = vld [vmem:[#allocation5 + $0x20] sm:$0xf]
    %v75 = vld [vmem:[#allocation5 + $0x24] sm:$0xf]
    %v76 = vld [vmem:[#allocation5 + $0x28] sm:$0xf]
    %v77 = vld [vmem:[#allocation5 + $0x2c] sm:$0xf]
    %v78 = vld [vmem:[#allocation5 + $0x30] sm:$0xf]
    %v79 = vld [vmem:[#allocation5 + $0x34] sm:$0xf]
    %v80 = vld [vmem:[#allocation5 + $0x38] sm:$0xf]
    %v81 = vld [vmem:[#allocation5 + $0x3c] sm:$0xf]
    %v82 = vld [vmem:[%s2] sm:$0x1]
    %v84 = vlaneseq
    %v85 = vshrl.u32 %v84, 7
    %v86 = vsub.s32 0, %v85
    %v87 = vrot.slane %v82, %v86
    %v105 = vunpack.c.l.b16 %v66
    %v106 = vunpack.c.l.b16 %v67
    %v107 = vunpack.c.l.b16 %v68
    %v108 = vunpack.c.l.b16 %v69
    %v109 = vunpack.c.l.b16 %v70
    %v110 = vunpack.c.l.b16 %v71
    %v111 = vunpack.c.l.b16 %v72
    %v112 = vunpack.c.l.b16 %v73
    %v113 = vunpack.c.l.b16 %v74
    %v114 = vunpack.c.l.b16 %v75
    %v115 = vunpack.c.l.b16 %v76
    %v116 = vunpack.c.l.b16 %v77
    %v117 = vunpack.c.l.b16 %v78
    %v118 = vunpack.c.l.b16 %v79
    %v119 = vunpack.c.l.b16 %v80
    %v120 = vunpack.c.l.b16 %v81
    %v121 = vpack.c.b16 %v106, %v105
    %v122 = vpack.c.b16 %v108, %v107
    %v123 = vpack.c.b16 %v110, %v109
    %v124 = vpack.c.b16 %v112, %v111
    %v125 = vpack.c.b16 %v114, %v113
    %v126 = vpack.c.b16 %v116, %v115
    %v127 = vpack.c.b16 %v118, %v117
    %v128 = vpack.c.b16 %v120, %v119
    %137 = vmatprep.subr.bf16.mxu0 0
    %138 = vmatpush1.bf16.msra.mxu0 %v128
    %139 = vmatprep.subr.bf16.mxu0 0
    %140 = vmatpush1.bf16.msra.mxu0 %v127
    %141 = vmatprep.subr.bf16.mxu0 0
    %142 = vmatpush1.bf16.msra.mxu0 %v126
    %143 = vmatprep.subr.bf16.mxu0 0
    %144 = vmatpush1.bf16.msra.mxu0 %v125
    %145 = vmatprep.subr.bf16.mxu0 0
    %146 = vmatpush1.bf16.msra.mxu0 %v124
    %147 = vmatprep.subr.bf16.mxu0 0
    %148 = vmatpush1.bf16.msra.mxu0 %v123
    %149 = vmatprep.subr.bf16.mxu0 0
    %150 = vmatpush1.bf16.msra.mxu0 %v122
    %151 = vmatprep.subr.bf16.mxu0 0
    %152 = vmatpush1.bf16.msra.mxu0 %v121
    %153 = vmatprep.subr.bf16.mxu0 0
    %154 = vmatpush2.bf16.msra.mxu0 0
    %155 = vmatprep.subr.bf16.mxu0 0
    %156 = vmatpush2.bf16.msra.mxu0 0
    %157 = vmatprep.subr.bf16.mxu0 0
    %158 = vmatpush2.bf16.msra.mxu0 0
    %159 = vmatprep.subr.bf16.mxu0 0
    %160 = vmatpush2.bf16.msra.mxu0 0
    %161 = vmatprep.subr.bf16.mxu0 0
    %162 = vmatpush2.bf16.msra.mxu0 0
    %163 = vmatprep.subr.bf16.mxu0 0
    %164 = vmatpush2.bf16.msra.mxu0 0
    %165 = vmatprep.subr.bf16.mxu0 0
    %166 = vmatpush2.bf16.msra.mxu0 0
    %167 = vmatprep.subr.bf16.mxu0 0
    %168 = vmatpush2.bf16.msra.mxu0 0
    %169 = vmatprep.mubr.bf16.mxu0 0
    %170 = vmatmul.mubr.bf16.gmra.mxu0 %v65
    %v171 = vpop.f32.mrf.mxu0
    %v172 = vadd.f32 %v87, %v171
    %v173 = vpop.f32.mrf.mxu0
    %v174 = vpop.f32.mrf.mxu0
    %v175 = vadd.f32 %v87, %v174
    %v176 = vpop.f32.mrf.mxu0
    %177 = vdwg.mxu0
    %v178 = vmax.f32 %v172, 0.0
    %v179 = vmax.f32 %v175, 0.0
    %v180 = vpack.c.bf16 %v179, %v178
    %v181 = vld [vmem:[#allocation7] sm:$0xf]
    %v182 = vld [vmem:[#allocation7 + $0x4] sm:$0xf]
    %v183 = vld [vmem:[#allocation7 + $0x8] sm:$0xf]
    %v184 = vld [vmem:[#allocation7 + $0xc] sm:$0xf]
    %v185 = vld [vmem:[#allocation7 + $0x10] sm:$0xf]
    %v186 = vld [vmem:[#allocation7 + $0x14] sm:$0xf]
    %v187 = vld [vmem:[#allocation7 + $0x18] sm:$0xf]
    %v188 = vld [vmem:[#allocation7 + $0x1c] sm:$0xf]
    %v189 = vld [vmem:[#allocation7 + $0x20] sm:$0xf]
    %v190 = vld [vmem:[#allocation7 + $0x24] sm:$0xf]
    %v191 = vld [vmem:[#allocation7 + $0x28] sm:$0xf]
    %v192 = vld [vmem:[#allocation7 + $0x2c] sm:$0xf]
    %v193 = vld [vmem:[#allocation7 + $0x30] sm:$0xf]
    %v194 = vld [vmem:[#allocation7 + $0x34] sm:$0xf]
    %v195 = vld [vmem:[#allocation7 + $0x38] sm:$0xf]
    %v196 = vld [vmem:[#allocation7 + $0x3c] sm:$0xf]
    %v197 = vld [vmem:[%s4] sm:$0x1]
    %v199 = vlaneseq
    %v200 = vshrl.u32 %v199, 7
    %v201 = vsub.s32 0, %v200
    %v202 = vrot.slane %v197, %v201
    %v220 = vunpack.c.l.b16 %v181
    %v221 = vunpack.c.l.b16 %v182
    %v222 = vunpack.c.l.b16 %v183
    %v223 = vunpack.c.l.b16 %v184
    %v224 = vunpack.c.l.b16 %v185
    %v225 = vunpack.c.l.b16 %v186
    %v226 = vunpack.c.l.b16 %v187
    %v227 = vunpack.c.l.b16 %v188
    %v228 = vunpack.c.l.b16 %v189
    %v229 = vunpack.c.l.b16 %v190
    %v230 = vunpack.c.l.b16 %v191
    %v231 = vunpack.c.l.b16 %v192
    %v232 = vunpack.c.l.b16 %v193
    %v233 = vunpack.c.l.b16 %v194
    %v234 = vunpack.c.l.b16 %v195
    %v235 = vunpack.c.l.b16 %v196
    %v236 = vpack.c.b16 %v221, %v220
    %v237 = vpack.c.b16 %v223, %v222
    %v238 = vpack.c.b16 %v225, %v224
    %v239 = vpack.c.b16 %v227, %v226
    %v240 = vpack.c.b16 %v229, %v228
    %v241 = vpack.c.b16 %v231, %v230
    %v242 = vpack.c.b16 %v233, %v232
    %v243 = vpack.c.b16 %v235, %v234
    %252 = vmatprep.subr.bf16.mxu0 0
    %253 = vmatpush1.bf16.msra.mxu0 %v243
    %254 = vmatprep.subr.bf16.mxu0 0
    %255 = vmatpush1.bf16.msra.mxu0 %v242
    %256 = vmatprep.subr.bf16.mxu0 0
    %257 = vmatpush1.bf16.msra.mxu0 %v241
    %258 = vmatprep.subr.bf16.mxu0 0
    %259 = vmatpush1.bf16.msra.mxu0 %v240
    %260 = vmatprep.subr.bf16.mxu0 0
    %261 = vmatpush1.bf16.msra.mxu0 %v239
    %262 = vmatprep.subr.bf16.mxu0 0
    %263 = vmatpush1.bf16.msra.mxu0 %v238
    %264 = vmatprep.subr.bf16.mxu0 0
    %265 = vmatpush1.bf16.msra.mxu0 %v237
    %266 = vmatprep.subr.bf16.mxu0 0
    %267 = vmatpush1.bf16.msra.mxu0 %v236
    %268 = vmatprep.subr.bf16.mxu0 0
    %269 = vmatpush2.bf16.msra.mxu0 0
    %270 = vmatprep.subr.bf16.mxu0 0
    %271 = vmatpush2.bf16.msra.mxu0 0
    %272 = vmatprep.subr.bf16.mxu0 0
    %273 = vmatpush2.bf16.msra.mxu0 0
    %274 = vmatprep.subr.bf16.mxu0 0
    %275 = vmatpush2.bf16.msra.mxu0 0
    %276 = vmatprep.subr.bf16.mxu0 0
    %277 = vmatpush2.bf16.msra.mxu0 0
    %278 = vmatprep.subr.bf16.mxu0 0
    %279 = vmatpush2.bf16.msra.mxu0 0
    %280 = vmatprep.subr.bf16.mxu0 0
    %281 = vmatpush2.bf16.msra.mxu0 0
    %282 = vmatprep.subr.bf16.mxu0 0
    %283 = vmatpush2.bf16.msra.mxu0 0
    %284 = vmatprep.mubr.bf16.mxu0 0
    %285 = vmatmul.mubr.bf16.gmra.mxu0 %v180
    %v286 = vpop.f32.mrf.mxu0
    %v287 = vadd.f32 %v202, %v286
    %v288 = vpop.f32.mrf.mxu0
    %v289 = vpop.f32.mrf.mxu0
    %v290 = vadd.f32 %v202, %v289
    %v291 = vpop.f32.mrf.mxu0
    %292 = vdwg.mxu0
    %293 = vst [vmem:[#allocation8] sm:$0xff] %v287
    %294 = vst [vmem:[#allocation8 + $0x8] sm:$0xff] %v290
    // Predicated region
    $region34: #{tpu_custom_call.1} parent=1 // pred_check
      _
    $region35: #{tpu_custom_call.1} parent=1 // pred_check_branch
      %296 = sbr.rel (0) target = $region37
    $region36: #{tpu_custom_call.1} parent=1 // pred_region
      %s298 = ssub.s32 256, 256
      %299 = vsyncadd [#allocation4], %s298
      %s300 = sshll.u32 [#allocation8], 4
      %s301 = int_to_ptr.vmem [resolvable:$true] %s300
      %306 = dma.vmem_to_hbm [thread:$0]  %s301, 256, %s5, [#allocation4], 128, 128, 8
    $region37: #{tpu_custom_call.1} parent=1 // pred_fallthru
      _
    // Predicated region
    $region38: #{tpu_custom_call.1} parent=1 // pred_check
      _
    $region39: #{tpu_custom_call.1} parent=1 // pred_check_branch
      %308 = sbr.rel (0) target = $region41
    $region40: #{tpu_custom_call.1} parent=1 // pred_region
      %309 = dma.done [#allocation4], 256
    $region41: #{tpu_custom_call.1} parent=1 // pred_fallthru
      _
    %310 = vsyncpa [#allocation3], 1
    %311 = vsyncpa [#allocation6], 1
    %312 = vsyncpa [#allocation4], 1

// kernel: tpu_custom_call.1
$region0: #{tpu_custom_call.1}
  #allocation0 [shape = 'u32[]', space=smem, size = 0x4, offset = 0x4, fixed_abs, tag = 'smem constant byte address 0x4 - core index']
  #allocation1 [shape = 'u32[144,128]{1,0:T(1,128)}', space=vmem, size = 0x12000, scoped, tag = 'internal scratch']
  %s0 = inlined_call_operand.hbm [shape: f32[16,128], index: 0, kind: input, shape index: {}]
  %s1 = inlined_call_operand.hbm [shape: bf16[128,128], index: 1, kind: input, shape index: {}]
  %s2 = inlined_call_operand.vmem [shape: f32[1,128], index: 2, kind: input, shape index: {}]
  %s3 = inlined_call_operand.hbm [shape: bf16[128,128], index: 3, kind: input, shape index: {}]
  %s4 = inlined_call_operand.vmem [shape: f32[1,128], index: 4, kind: input, shape index: {}]
  %s5 = inlined_call_operand.hbm [shape: f32[16,128], index: 5, kind: output, shape index: {}]
  %s6 = sld [smem:[#allocation0]]
  $region42: #{tpu_custom_call.1} parent=0
    _
  %s8 = ssub.s32 1, %s6
  %s9 = scalar_select 0, %s8, %s6
  $region1: #{tpu_custom_call.1} parent=0
    #allocation2 [shape = 'u8[8192]{0}', space=vmem, size = 0x2000, scoped, tag = 'input window, operand 0, single buffered']
    #allocation3 [shape = 's32[1]{0}', space=sflag, size = 0x4, scoped, tag = 'scoped memory for tpu_custom_call.1']
    #allocation4 [shape = 's32[1]{0}', space=sflag, size = 0x4, scoped, tag = 'scoped memory for tpu_custom_call.1']
    #allocation5 [shape = 'u8[32768]{0}', space=vmem, size = 0x8000, scoped, tag = 'input window, operand 1, single buffered']
    #allocation6 [shape = 's32[1]{0}', space=sflag, size = 0x4, scoped, tag = 'scoped memory for tpu_custom_call.1']
    #allocation7 [shape = 'u8[32768]{0}', space=vmem, size = 0x8000, scoped, tag = 'input window, operand 3, single buffered']
    #allocation8 [shape = 'u8[8192]{0}', space=vmem, size = 0x2000, scoped, tag = 'output window, operand 0, single buffered']
    %10 = vsyncpa [#allocation3], 0
    %11 = vsyncpa [#allocation6], 0
    %12 = vsyncpa [#allocation4], 0
    // Predicated region
    $region2: #{tpu_custom_call.1} parent=1 // pred_check
      _
    $region3: #{tpu_custom_call.1} parent=1 // pred_check_branch
      %14 = sbr.rel (0) target = $region5
    $region4: #{tpu_custom_call.1} parent=1 // pred_region
      %s16 = ssub.s32 256, 256
      %17 = vsyncadd [#allocation3], %s16
      %s18 = sshll.u32 [#allocation2], 4
      %s19 = int_to_ptr.vmem [resolvable:$true] %s18
      %24 = dma.hbm_to_vmem [thread:$0]  %s0, 256, %s19, [#allocation3], 128, 128, 8
    $region5: #{tpu_custom_call.1} parent=1 // pred_fallthru
      _
    // Predicated region
    $region6: #{tpu_custom_call.1} parent=1 // pred_check
      _
    $region7: #{tpu_custom_call.1} parent=1 // pred_check_branch
      %26 = sbr.rel (0) target = $region9
    $region8: #{tpu_custom_call.1} parent=1 // pred_region
      %s28 = ssub.s32 1024, 1024
      %29 = vsyncadd [#allocation6], %s28
      %s30 = sshll.u32 [#allocation5], 4
      %s31 = int_to_ptr.vmem [resolvable:$true] %s30
      %36 = dma.hbm_to_vmem [thread:$0]  %s1, 1024, %s31, [#allocation6], 64, 64, 4
    $region9: #{tpu_custom_call.1} parent=1 // pred_fallthru
      _
    // Predicated region
    $region10: #{tpu_custom_call.1} parent=1 // pred_check
      _
    $region11: #{tpu_custom_call.1} parent=1 // pred_check_branch
      %38 = sbr.rel (0) target = $region13
    $region12: #{tpu_custom_call.1} parent=1 // pred_region
      _
    $region13: #{tpu_custom_call.1} parent=1 // pred_fallthru
      _
    // Predicated region
    $region14: #{tpu_custom_call.1} parent=1 // pred_check
      _
    $region15: #{tpu_custom_call.1} parent=1 // pred_check_branch
      %40 = sbr.rel (0) target = $region17
    $region16: #{tpu_custom_call.1} parent=1 // pred_region
      %s42 = ssub.s32 1024, 1024
      %43 = vsyncadd [#allocation6], %s42
      %s44 = sshll.u32 [#allocation7], 4
      %s45 = int_to_ptr.vmem [resolvable:$true] %s44
      %50 = dma.hbm_to_vmem [thread:$0]  %s3, 1024, %s45, [#allocation6], 64, 64, 4
    $region17: #{tpu_custom_call.1} parent=1 // pred_fallthru
      _
    // Predicated region
    $region18: #{tpu_custom_call.1} parent=1 // pred_check
      _
    $region19: #{tpu_custom_call.1} parent=1 // pred_check_branch
      %52 = sbr.rel (0) target = $region21
    $region20: #{tpu_custom_call.1} parent=1 // pred_region
      _
    $region21: #{tpu_custom_call.1} parent=1 // pred_fallthru
      _
    // Predicated region
    $region22: #{tpu_custom_call.1} parent=1 // pred_check
      _
    $region23: #{tpu_custom_call.1} parent=1 // pred_check_branch
      %54 = sbr.rel (0) target = $region25
    $region24: #{tpu_custom_call.1} parent=1 // pred_region
      %55 = dma.done [#allocation3], 256
    $region25: #{tpu_custom_call.1} parent=1 // pred_fallthru
      _
    // Predicated region
    $region26: #{tpu_custom_call.1} parent=1 // pred_check
      _
    $region27: #{tpu_custom_call.1} parent=1 // pred_check_branch
      %57 = sbr.rel (0) target = $region29
    $region28: #{tpu_custom_call.1} parent=1 // pred_region
      %58 = dma.done [#allocation6], 1024
    $region29: #{tpu_custom_call.1} parent=1 // pred_fallthru
      _
    // Predicated region
    $region30: #{tpu_custom_call.1} parent=1 // pred_check
      _
    $region31: #{tpu_custom_call.1} parent=1 // pred_check_branch
      %60 = sbr.rel (0) target = $region33
    $region32: #{tpu_custom_call.1} parent=1 // pred_region
      %61 = dma.done [#allocation6], 1024
    $region33: #{tpu_custom_call.1} parent=1 // pred_fallthru
      _
    %v63 = vld [vmem:[#allocation2] sm:$0xff]
    %v64 = vld [vmem:[#allocation2 + $0x8] sm:$0xff]
    %v65 = vpack.c.bf16 %v64, %v63
    %v66 = vld [vmem:[#allocation5] sm:$0xf]
    %v67 = vld [vmem:[#allocation5 + $0x4] sm:$0xf]
    %v68 = vld [vmem:[#allocation5 + $0x8] sm:$0xf]
    %v69 = vld [vmem:[#allocation5 + $0xc] sm:$0xf]
    %v70 = vld [vmem:[#allocation5 + $0x10] sm:$0xf]
    %v71 = vld [vmem:[#allocation5 + $0x14] sm:$0xf]
    %v72 = vld [vmem:[#allocation5 + $0x18] sm:$0xf]
    %v73 = vld [vmem:[#allocation5 + $0x1c] sm:$0xf]
    %v74 = vld [vmem:[#allocation5 + $0x20] sm:$0xf]
    %v75 = vld [vmem:[#allocation5 + $0x24] sm:$0xf]
    %v76 = vld [vmem:[#allocation5 + $0x28] sm:$0xf]
    %v77 = vld [vmem:[#allocation5 + $0x2c] sm:$0xf]
    %v78 = vld [vmem:[#allocation5 + $0x30] sm:$0xf]
    %v79 = vld [vmem:[#allocation5 + $0x34] sm:$0xf]
    %v80 = vld [vmem:[#allocation5 + $0x38] sm:$0xf]
    %v81 = vld [vmem:[#allocation5 + $0x3c] sm:$0xf]
    %v82 = vld [vmem:[%s2] sm:$0x1]
    %v84 = vlaneseq
    %v85 = vshrl.u32 %v84, 7
    %v86 = vsub.s32 0, %v85
    %v87 = vrot.slane %v82, %v86
    %v105 = vunpack.c.l.b16 %v66
    %v106 = vunpack.c.l.b16 %v67
    %v107 = vunpack.c.l.b16 %v68
    %v108 = vunpack.c.l.b16 %v69
    %v109 = vunpack.c.l.b16 %v70
    %v110 = vunpack.c.l.b16 %v71
    %v111 = vunpack.c.l.b16 %v72
    %v112 = vunpack.c.l.b16 %v73
    %v113 = vunpack.c.l.b16 %v74
    %v114 = vunpack.c.l.b16 %v75
    %v115 = vunpack.c.l.b16 %v76
    %v116 = vunpack.c.l.b16 %v77
    %v117 = vunpack.c.l.b16 %v78
    %v118 = vunpack.c.l.b16 %v79
    %v119 = vunpack.c.l.b16 %v80
    %v120 = vunpack.c.l.b16 %v81
    %v121 = vpack.c.b16 %v106, %v105
    %v122 = vpack.c.b16 %v108, %v107
    %v123 = vpack.c.b16 %v110, %v109
    %v124 = vpack.c.b16 %v112, %v111
    %v125 = vpack.c.b16 %v114, %v113
    %v126 = vpack.c.b16 %v116, %v115
    %v127 = vpack.c.b16 %v118, %v117
    %v128 = vpack.c.b16 %v120, %v119
    %137 = vmatprep.subr.bf16.mxu0 0
    %138 = vmatpush1.bf16.msra.mxu0 %v128
    %139 = vmatprep.subr.bf16.mxu0 0
    %140 = vmatpush1.bf16.msra.mxu0 %v127
    %141 = vmatprep.subr.bf16.mxu0 0
    %142 = vmatpush1.bf16.msra.mxu0 %v126
    %143 = vmatprep.subr.bf16.mxu0 0
    %144 = vmatpush1.bf16.msra.mxu0 %v125
    %145 = vmatprep.subr.bf16.mxu0 0
    %146 = vmatpush1.bf16.msra.mxu0 %v124
    %147 = vmatprep.subr.bf16.mxu0 0
    %148 = vmatpush1.bf16.msra.mxu0 %v123
    %149 = vmatprep.subr.bf16.mxu0 0
    %150 = vmatpush1.bf16.msra.mxu0 %v122
    %151 = vmatprep.subr.bf16.mxu0 0
    %152 = vmatpush1.bf16.msra.mxu0 %v121
    %153 = vmatprep.subr.bf16.mxu0 0
    %154 = vmatpush2.bf16.msra.mxu0 0
    %155 = vmatprep.subr.bf16.mxu0 0
    %156 = vmatpush2.bf16.msra.mxu0 0
    %157 = vmatprep.subr.bf16.mxu0 0
    %158 = vmatpush2.bf16.msra.mxu0 0
    %159 = vmatprep.subr.bf16.mxu0 0
    %160 = vmatpush2.bf16.msra.mxu0 0
    %161 = vmatprep.subr.bf16.mxu0 0
    %162 = vmatpush2.bf16.msra.mxu0 0
    %163 = vmatprep.subr.bf16.mxu0 0
    %164 = vmatpush2.bf16.msra.mxu0 0
    %165 = vmatprep.subr.bf16.mxu0 0
    %166 = vmatpush2.bf16.msra.mxu0 0
    %167 = vmatprep.subr.bf16.mxu0 0
    %168 = vmatpush2.bf16.msra.mxu0 0
    %169 = vmatprep.mubr.bf16.mxu0 0
    %170 = vmatmul.mubr.bf16.gmra.mxu0 %v65
    %v171 = vpop.f32.mrf.mxu0
    %v172 = vadd.f32 %v87, %v171
    %v173 = vpop.f32.mrf.mxu0
    %v174 = vpop.f32.mrf.mxu0
    %v175 = vadd.f32 %v87, %v174
    %v176 = vpop.f32.mrf.mxu0
    %177 = vdwg.mxu0
    %v178 = vmax.f32 %v172, 0.0
    %v179 = vmax.f32 %v175, 0.0
    %v180 = vpack.c.bf16 %v179, %v178
    %v181 = vld [vmem:[#allocation7] sm:$0xf]
    %v182 = vld [vmem:[#allocation7 + $0x4] sm:$0xf]
    %v183 = vld [vmem:[#allocation7 + $0x8] sm:$0xf]
    %v184 = vld [vmem:[#allocation7 + $0xc] sm:$0xf]
    %v185 = vld [vmem:[#allocation7 + $0x10] sm:$0xf]
    %v186 = vld [vmem:[#allocation7 + $0x14] sm:$0xf]
    %v187 = vld [vmem:[#allocation7 + $0x18] sm:$0xf]
    %v188 = vld [vmem:[#allocation7 + $0x1c] sm:$0xf]
    %v189 = vld [vmem:[#allocation7 + $0x20] sm:$0xf]
    %v190 = vld [vmem:[#allocation7 + $0x24] sm:$0xf]
    %v191 = vld [vmem:[#allocation7 + $0x28] sm:$0xf]
    %v192 = vld [vmem:[#allocation7 + $0x2c] sm:$0xf]
    %v193 = vld [vmem:[#allocation7 + $0x30] sm:$0xf]
    %v194 = vld [vmem:[#allocation7 + $0x34] sm:$0xf]
    %v195 = vld [vmem:[#allocation7 + $0x38] sm:$0xf]
    %v196 = vld [vmem:[#allocation7 + $0x3c] sm:$0xf]
    %v197 = vld [vmem:[%s4] sm:$0x1]
    %v199 = vlaneseq
    %v200 = vshrl.u32 %v199, 7
    %v201 = vsub.s32 0, %v200
    %v202 = vrot.slane %v197, %v201
    %v220 = vunpack.c.l.b16 %v181
    %v221 = vunpack.c.l.b16 %v182
    %v222 = vunpack.c.l.b16 %v183
    %v223 = vunpack.c.l.b16 %v184
    %v224 = vunpack.c.l.b16 %v185
    %v225 = vunpack.c.l.b16 %v186
    %v226 = vunpack.c.l.b16 %v187
    %v227 = vunpack.c.l.b16 %v188
    %v228 = vunpack.c.l.b16 %v189
    %v229 = vunpack.c.l.b16 %v190
    %v230 = vunpack.c.l.b16 %v191
    %v231 = vunpack.c.l.b16 %v192
    %v232 = vunpack.c.l.b16 %v193
    %v233 = vunpack.c.l.b16 %v194
    %v234 = vunpack.c.l.b16 %v195
    %v235 = vunpack.c.l.b16 %v196
    %v236 = vpack.c.b16 %v221, %v220
    %v237 = vpack.c.b16 %v223, %v222
    %v238 = vpack.c.b16 %v225, %v224
    %v239 = vpack.c.b16 %v227, %v226
    %v240 = vpack.c.b16 %v229, %v228
    %v241 = vpack.c.b16 %v231, %v230
    %v242 = vpack.c.b16 %v233, %v232
    %v243 = vpack.c.b16 %v235, %v234
    %252 = vmatprep.subr.bf16.mxu0 0
    %253 = vmatpush1.bf16.msra.mxu0 %v243
    %254 = vmatprep.subr.bf16.mxu0 0
    %255 = vmatpush1.bf16.msra.mxu0 %v242
    %256 = vmatprep.subr.bf16.mxu0 0
    %257 = vmatpush1.bf16.msra.mxu0 %v241
    %258 = vmatprep.subr.bf16.mxu0 0
    %259 = vmatpush1.bf16.msra.mxu0 %v240
    %260 = vmatprep.subr.bf16.mxu0 0
    %261 = vmatpush1.bf16.msra.mxu0 %v239
    %262 = vmatprep.subr.bf16.mxu0 0
    %263 = vmatpush1.bf16.msra.mxu0 %v238
    %264 = vmatprep.subr.bf16.mxu0 0
    %265 = vmatpush1.bf16.msra.mxu0 %v237
    %266 = vmatprep.subr.bf16.mxu0 0
    %267 = vmatpush1.bf16.msra.mxu0 %v236
    %268 = vmatprep.subr.bf16.mxu0 0
    %269 = vmatpush2.bf16.msra.mxu0 0
    %270 = vmatprep.subr.bf16.mxu0 0
    %271 = vmatpush2.bf16.msra.mxu0 0
    %272 = vmatprep.subr.bf16.mxu0 0
    %273 = vmatpush2.bf16.msra.mxu0 0
    %274 = vmatprep.subr.bf16.mxu0 0
    %275 = vmatpush2.bf16.msra.mxu0 0
    %276 = vmatprep.subr.bf16.mxu0 0
    %277 = vmatpush2.bf16.msra.mxu0 0
    %278 = vmatprep.subr.bf16.mxu0 0
    %279 = vmatpush2.bf16.msra.mxu0 0
    %280 = vmatprep.subr.bf16.mxu0 0
    %281 = vmatpush2.bf16.msra.mxu0 0
    %282 = vmatprep.subr.bf16.mxu0 0
    %283 = vmatpush2.bf16.msra.mxu0 0
    %284 = vmatprep.mubr.bf16.mxu0 0
    %285 = vmatmul.mubr.bf16.gmra.mxu0 %v180
    %v286 = vpop.f32.mrf.mxu0
    %v287 = vadd.f32 %v202, %v286
    %v288 = vpop.f32.mrf.mxu0
    %v289 = vpop.f32.mrf.mxu0
    %v290 = vadd.f32 %v202, %v289
    %v291 = vpop.f32.mrf.mxu0
    %292 = vdwg.mxu0
    %293 = vst [vmem:[#allocation8] sm:$0xff] %v287
    %294 = vst [vmem:[#allocation8 + $0x8] sm:$0xff] %v290
    // Predicated region
    $region34: #{tpu_custom_call.1} parent=1 // pred_check
      _
    $region35: #{tpu_custom_call.1} parent=1 // pred_check_branch
      %296 = sbr.rel (0) target = $region37
    $region36: #{tpu_custom_call.1} parent=1 // pred_region
      %s298 = ssub.s32 256, 256
      %299 = vsyncadd [#allocation4], %s298
      %s300 = sshll.u32 [#allocation8], 4
      %s301 = int_to_ptr.vmem [resolvable:$true] %s300
      %306 = dma.vmem_to_hbm [thread:$0]  %s301, 256, %s5, [#allocation4], 128, 128, 8
    $region37: #{tpu_custom_call.1} parent=1 // pred_fallthru
      _
    // Predicated region
    $region38: #{tpu_custom_call.1} parent=1 // pred_check
      _
    $region39: #{tpu_custom_call.1} parent=1 // pred_check_branch
      %308 = sbr.rel (0) target = $region41
    $region40: #{tpu_custom_call.1} parent=1 // pred_region
      %309 = dma.done [#allocation4], 256
    $region41: #{tpu_custom_call.1} parent=1 // pred_fallthru
      _
    %310 = vsyncpa [#allocation3], 1
    %311 = vsyncpa [#allocation6], 1
    %312 = vsyncpa [#allocation4], 1

</llo_original>
